<compile_context>
chip_gen: v5e
topology: v5e:2x2
jax: 0.10.0
libtpu: 0.0.40
codegen_flags: <defaults>
</compile_context>

<pallas_src>
import jax
import jax.numpy as jnp
import numpy as np
from jax.experimental import pallas as pl
from jax.experimental.pallas import tpu as pltpu


def _round_up(x, m):
    return ((x + m - 1) // m) * m


def _round_down(x, m):
    return (x // m) * m


# ----------------------------------------------------------------------------- kernels


def _basic_block2_kernel(prelu_ref, x_ref, w1_ref, s1_ref, w2_ref, s2_ref, o_ref):
    """Fully fused block; w1/w2 resident in VMEM, BN scale/bias pre-folded into them."""
    a1 = prelu_ref[0]
    a2 = prelu_ref[1]
    x = x_ref[...].astype(w1_ref.dtype)            # in-kernel cast (no wrapper HBM pass)
    h = jnp.dot(x, w1_ref[...], preferred_element_type=jnp.float32) + s1_ref[...]
    h = jnp.where(h >= 0.0, h, a1 * h)             # PReLU; Dropout (eval) = identity
    y = jnp.dot(h.astype(w2_ref.dtype), w2_ref[...],
                preferred_element_type=jnp.float32) + s2_ref[...]
    y = jnp.where(y >= 0.0, y, a2 * y)
    o_ref[...] = y.astype(o_ref.dtype)


def _basic_block2_ktiled_kernel(prelu_ref, x_ref, w1_ref, s1_ref, w2_ref, s2_ref,
                                o_ref, h_acc):
    """Fallback for large Din: stream w1 over a K grid axis, accumulate h in f32 scratch."""
    k = pl.program_id(1)

    @pl.when(k == 0)
    def _():
        h_acc[...] = jnp.zeros_like(h_acc)

    x = x_ref[...].astype(w1_ref.dtype)
    h_acc[...] += jnp.dot(x, w1_ref[...], preferred_element_type=jnp.float32)

    @pl.when(k == pl.num_programs(1) - 1)
    def _():
        h = h_acc[...] + s1_ref[...]
        h = jnp.where(h >= 0.0, h, prelu_ref[0] * h)
        y = jnp.dot(h.astype(w2_ref.dtype), w2_ref[...],
                    preferred_element_type=jnp.float32) + s2_ref[...]
        o_ref[...] = jnp.where(y >= 0.0, y, prelu_ref[1] * y).astype(o_ref.dtype)


# ----------------------------------------------------------------------------- wrapper


def _pick_tile_rows(n_rows, per_row_bytes, fixed_bytes, budget, max_tile, min_steps):
    """Biggest row tile that fits the VMEM budget, with >= min_steps grid steps on big N."""
    avail = max(budget - fixed_bytes, 8 * per_row_bytes)
    t = min(max_tile, max(8, avail // per_row_bytes))
    if n_rows >= min_steps * 128:          # keep both v7x TCs busy + per-core pipelining
        t = min(t, n_rows // min_steps)
    if t >= n_rows:
        return n_rows                      # single full block (legal for any n_rows)
    return max(8, _round_down(t, 8))


def basic_block2_forward(x, params, *, use_bf16=False, eps=1e-5, max_tile_n=2048,
                         min_grid_steps=4, force_k_tiling=False, k_tile=512):
    """Eval-mode BasicBlock2 forward. x: (N, input_dim) float32 -> (N, output_dim) float32."""
    N, Din = x.shape
    Dh = params["w1"].shape[1]
    Dout = params["w2"].shape[1]

    # ---- fold BatchNorm (running stats) + Linear bias into weights / shifts (tiny glue) ----
    bn1_scale = params["bn1_gamma"] / jnp.sqrt(params["bn1_var"] + eps)
    bn1_shift = params["bn1_beta"] - params["bn1_mean"] * bn1_scale
    bn2_scale = params["bn2_gamma"] / jnp.sqrt(params["bn2_var"] + eps)
    bn2_shift = params["bn2_beta"] - params["bn2_mean"] * bn2_scale

    compute_dtype = jnp.bfloat16 if use_bf16 else jnp.float32
    w_elt = jnp.dtype(compute_dtype).itemsize
    x_elt = jnp.dtype(x.dtype).itemsize

    w1f = (params["w1"] * bn1_scale[None, :]).astype(compute_dtype)
    s1 = (params["b1"] * bn1_scale + bn1_shift).reshape(1, Dh).astype(jnp.float32)
    w2f = (params["w2"] * bn2_scale[None, :]).astype(compute_dtype)
    s2 = (params["b2"] * bn2_scale + bn2_shift).reshape(1, Dout).astype(jnp.float32)
    prelu = jnp.stack(
        [params["prelu1"].reshape(()), params["prelu2"].reshape(())]
    ).astype(jnp.float32)

    # ---- generation-aware VMEM budget ----
    try:
        vmem_cap = int(pltpu.get_tpu_info().vmem_capacity_bytes)
    except Exception:
        vmem_cap = 64 * 1024 * 1024        # conservative default (v7x per-TC VMEM)
    budget = int(0.6 * vmem_cap)

    resident_w_bytes = (Din * Dh + Dh * Dout) * w_elt + (Dh + Dout) * 4
    use_k_tiling = (force_k_tiling or 2 * resident_w_bytes > budget) and Din >= 256
    # TODO(synk): if Dh*Dout alone overflows VMEM, an extra grid axis over Dout would also be
    #             needed; not implemented (weights that large are unusual for this block).

    if not use_k_tiling:
        x_in = x
        tk = Din
        # per-row VMEM: 2x x tile (double buffer), 2x f32 out tile, f32 h + epilogue scratch.
        per_row = 2 * Din * x_elt + 3 * Dout * 4 + 2 * Dh * 4
        tile_n = _pick_tile_rows(N, per_row, 2 * resident_w_bytes, budget,
                                 max_tile_n, min_grid_steps)
        grid = (pl.cdiv(N, tile_n),)
        dims = ("parallel",)
        vmem_est = 2 * resident_w_bytes + tile_n * per_row + (2 << 20)
    else:
        tk = max(128, _round_down(min(k_tile, _round_up(Din, 128)), 128))
        Din_p = _round_up(Din, tk)
        if Din_p != Din:                   # only this rare path pads x (along Din)
            x_in = jnp.pad(x, ((0, 0), (0, Din_p - Din)))
            w1f = jnp.pad(w1f, ((0, Din_p - Din), (0, 0)))
        else:
            x_in = x
        fixed = 2 * tk * Dh * w_elt + 2 * (Dh * Dout * w_elt + (Dh + Dout) * 4)
        per_row = 2 * tk * x_elt + 3 * Dout * 4 + 2 * Dh * 4
        tile_n = _pick_tile_rows(N, per_row, fixed, budget, max_tile_n, min_grid_steps)
        grid = (pl.cdiv(N, tile_n), Din_p // tk)
        dims = ("parallel", "arbitrary")
        vmem_est = fixed + tile_n * per_row + (2 << 20)

    flops = 2 * N * (Din * Dh + Dh * Dout)
    bytes_accessed = (N * Din * x_elt + (Din * Dh + Dh * Dout) * w_elt
                      + (Dh + Dout) * 4 + N * Dout * 4)
    cost = pl.CostEstimate(flops=int(flops), transcendentals=0,
                           bytes_accessed=int(bytes_accessed))

    vmem_limit = int(min(0.9 * vmem_cap, max(32 * (1 << 20), vmem_est * 3 // 2)))
    cparams = pltpu.CompilerParams(dimension_semantics=dims, vmem_limit_bytes=vmem_limit)
    out_shape = jax.ShapeDtypeStruct((N, Dout), jnp.float32)

    def _call(single_buffer_weights):
        wkw = {"pipeline_mode": pl.Buffered(1)} if single_buffer_weights else {}
        smem_spec = pl.BlockSpec(memory_space=pltpu.MemorySpace.SMEM)
        if not use_k_tiling:
            in_specs = [
                smem_spec,                                               # prelu slopes (2,)
                pl.BlockSpec((tile_n, Din), lambda i: (i, 0)),           # x tile (streamed)
                pl.BlockSpec((Din, Dh), lambda i: (0, 0), **wkw),        # w1' (resident)
                pl.BlockSpec((1, Dh), lambda i: (0, 0), **wkw),          # shift1'
                pl.BlockSpec((Dh, Dout), lambda i: (0, 0), **wkw),       # w2' (resident)
                pl.BlockSpec((1, Dout), lambda i: (0, 0), **wkw),        # shift2'
            ]
            return pl.pallas_call(
                _basic_block2_kernel,
                out_shape=out_shape,
                grid=grid,
                in_specs=in_specs,
                out_specs=pl.BlockSpec((tile_n, Dout), lambda i: (i, 0)),
                compiler_params=cparams,
                cost_estimate=cost,
            )(prelu, x_in, w1f, s1, w2f, s2)

        in_specs = [
            smem_spec,
            pl.BlockSpec((tile_n, tk), lambda i, k: (i, k)),             # x (N, K) tiles
            pl.BlockSpec((tk, Dh), lambda i, k: (k, 0)),                 # w1' streamed over K
            pl.BlockSpec((1, Dh), lambda i, k: (0, 0), **wkw),
            pl.BlockSpec((Dh, Dout), lambda i, k: (0, 0), **wkw),
            pl.BlockSpec((1, Dout), lambda i, k: (0, 0), **wkw),
        ]
        return pl.pallas_call(
            _basic_block2_ktiled_kernel,
            out_shape=out_shape,
            grid=grid,
            in_specs=in_specs,
            out_specs=pl.BlockSpec((tile_n, Dout), lambda i, k: (i, 0)),
            scratch_shapes=[pltpu.VMEM((tile_n, Dh), jnp.float32)],
            compiler_params=cparams,
            cost_estimate=cost,
        )(prelu, x_in, w1f, s1, w2f, s2)

    try:
        return _call(True)
    except Exception:
        # Fallback if this JAX build rejects single-buffered (pl.Buffered(1)) BlockSpecs.
        return _call(False)


# ----------------------------------------------------------------------------- params / ref


def init_params(key, input_dim, hidden_dim, output_dim):
    """Deterministic parameter init matching the shapes declared in BasicBlock2.__init__."""
    k1, k2, k3, k4 = jax.random.split(key, 4)
    bound1 = 1.0 / np.sqrt(input_dim)
    bound2 = 1.0 / np.sqrt(hidden_dim)
    return {
        # nn.Linear weights stored transposed vs PyTorch: (in, out) so kernel does x @ W.
        "w1": jax.random.uniform(k1, (input_dim, hidden_dim), jnp.float32, -bound1, bound1),
        "b1": jax.random.uniform(k2, (hidden_dim,), jnp.float32, -bound1, bound1),
        "w2": jax.random.uniform(k3, (hidden_dim, output_dim), jnp.float32, -bound2, bound2),
        "b2": jax.random.uniform(k4, (output_dim,), jnp.float32, -bound2, bound2),
        "bn1_gamma": jnp.ones((hidden_dim,), jnp.float32),
        "bn1_beta": jnp.zeros((hidden_dim,), jnp.float32),
        "bn1_mean": jnp.zeros((hidden_dim,), jnp.float32),
        "bn1_var": jnp.ones((hidden_dim,), jnp.float32),
        "bn2_gamma": jnp.ones((output_dim,), jnp.float32),
        "bn2_beta": jnp.zeros((output_dim,), jnp.float32),
        "bn2_mean": jnp.zeros((output_dim,), jnp.float32),
        "bn2_var": jnp.ones((output_dim,), jnp.float32),
        # PReLU default init = 0.25 (single shared parameter)
        "prelu1": jnp.array([0.25], jnp.float32),
        "prelu2": jnp.array([0.25], jnp.float32),
    }


def reference_forward(x, params, eps=1e-5):
    """Pure-JAX reference of the eval-mode forward."""
    h = x @ params["w1"] + params["b1"]
    h = (h - params["bn1_mean"]) / jnp.sqrt(params["bn1_var"] + eps) * params["bn1_gamma"] \
        + params["bn1_beta"]
    h = jnp.where(h >= 0, h, params["prelu1"][0] * h)
    y = h @ params["w2"] + params["b2"]
    y = (y - params["bn2_mean"]) / jnp.sqrt(params["bn2_var"] + eps) * params["bn2_gamma"] \
        + params["bn2_beta"]
    y = jnp.where(y >= 0, y, params["prelu2"][0] * y)
    return y


if __name__ == "__main__":
    key = jax.random.PRNGKey(0)
    kp1, kx1, kx2, kp3, kx3 = jax.random.split(key, 5)

    # 1) Small f32 check (resident-weight path, single full block).
    params = init_params(kp1, 32, 64, 32)
    x = jax.random.normal(kx1, (8, 32), jnp.float32)
    out = jax.block_until_ready(basic_block2_forward(x, params))
    np.testing.assert_allclose(np.asarray(out), np.asarray(reference_forward(x, params)),
                               rtol=2e-5, atol=1e-5)

    # 2) Ragged larger batch: auto-sized tiles, >=4 grid steps, masked partial last tile,
    #    bf16 MXU inputs with f32 accumulation (cast done inside the kernel).
    x2 = jax.random.normal(kx2, (1000, 32), jnp.float32)
    out2 = jax.block_until_ready(basic_block2_forward(x2, params, use_bf16=True))
    np.testing.assert_allclose(np.asarray(out2), np.asarray(reference_forward(x2, params)),
                               rtol=2e-2, atol=2e-2)

    # 3) Forced K-tiled fallback path (streams w1 over a Din grid axis with f32 accumulator).
    params3 = init_params(kp3, 256, 64, 32)
    x3 = jax.random.normal(kx3, (96, 256), jnp.float32)
    out3 = jax.block_until_ready(
        basic_block2_forward(x3, params3, force_k_tiling=True, k_tile=128))
    np.testing.assert_allclose(np.asarray(out3), np.asarray(reference_forward(x3, params3)),
                               rtol=2e-4, atol=2e-4)

    print("KERNEL_OK")
</pallas_src>

<mosaic_0001>
module attributes {stable_mosaic.version = 11 : i64} {
  func.func @_basic_block2_kernel(%arg0: i32, %arg1: memref<2xf32, #tpu.memory_space<smem>>, %arg2: memref<8x32xf32, #tpu.memory_space<vmem>>, %arg3: memref<32x64xf32, #tpu.memory_space<vmem>>, %arg4: memref<1x64xf32, #tpu.memory_space<vmem>>, %arg5: memref<64x32xf32, #tpu.memory_space<vmem>>, %arg6: memref<1x32xf32, #tpu.memory_space<vmem>>, %arg7: memref<8x32xf32, #tpu.memory_space<vmem>>) attributes {dimension_semantics = [#tpu.dimension_semantics<parallel>], iteration_bounds = array<i64: 1>, scalar_prefetch = 0 : i64, scratch_operands = 0 : i64, tpu.core_type = #tpu.core_type<tc>, window_params = [{transform_indices = @transform_0, window_bounds = array<i64: 2>}, {transform_indices = @transform_1, window_bounds = array<i64: 8, 32>}, {pipeline_mode = #tpu.pipeline_mode<synchronous>, transform_indices = @transform_2, window_bounds = array<i64: 32, 64>}, {pipeline_mode = #tpu.pipeline_mode<synchronous>, transform_indices = @transform_3, window_bounds = array<i64: 1, 64>}, {pipeline_mode = #tpu.pipeline_mode<synchronous>, transform_indices = @transform_4, window_bounds = array<i64: 64, 32>}, {pipeline_mode = #tpu.pipeline_mode<synchronous>, transform_indices = @transform_5, window_bounds = array<i64: 1, 32>}, {transform_indices = @transform_6, window_bounds = array<i64: 8, 32>}]} {
    %c0 = arith.constant 0 : index
    %0 = memref.load %arg1[%c0] : memref<2xf32, #tpu.memory_space<smem>>
    %c1 = arith.constant 1 : index
    %1 = memref.load %arg1[%c1] : memref<2xf32, #tpu.memory_space<smem>>
    %c0_0 = arith.constant 0 : index
    %c0_1 = arith.constant 0 : index
    %2 = vector.load %arg2[%c0_0, %c0_1] : memref<8x32xf32, #tpu.memory_space<vmem>>, vector<8x32xf32>
    %c0_2 = arith.constant 0 : index
    %c0_3 = arith.constant 0 : index
    %3 = vector.load %arg3[%c0_2, %c0_3] : memref<32x64xf32, #tpu.memory_space<vmem>>, vector<32x64xf32>
    %cst = arith.constant dense<0.000000e+00> : vector<8x64xf32>
    %4 = tpu.matmul %2, %3, %cst {dimension_numbers = #tpu.dot_dimension_numbers<[1], [0], [0], [1], [0, 0, 1, 1], [], []>} : vector<8x32xf32>, vector<32x64xf32>, vector<8x64xf32> -> vector<8x64xf32>
    %c0_4 = arith.constant 0 : index
    %c0_5 = arith.constant 0 : index
    %5 = vector.load %arg4[%c0_4, %c0_5] : memref<1x64xf32, #tpu.memory_space<vmem>>, vector<1x64xf32>
    %6 = vector.broadcast %5 : vector<1x64xf32> to vector<8x64xf32>
    %7 = arith.addf %4, %6 : vector<8x64xf32>
    %cst_6 = arith.constant 0.000000e+00 : f32
    %8 = vector.broadcast %cst_6 : f32 to vector<8x64xf32>
    %9 = arith.cmpf oge, %7, %8 : vector<8x64xf32>
    %10 = vector.broadcast %0 : f32 to vector<8x64xf32>
    %11 = arith.mulf %10, %7 : vector<8x64xf32>
    %12 = arith.select %9, %7, %11 : vector<8x64xi1>, vector<8x64xf32>
    %c0_7 = arith.constant 0 : index
    %c0_8 = arith.constant 0 : index
    %13 = vector.load %arg5[%c0_7, %c0_8] : memref<64x32xf32, #tpu.memory_space<vmem>>, vector<64x32xf32>
    %cst_9 = arith.constant dense<0.000000e+00> : vector<8x32xf32>
    %14 = tpu.matmul %12, %13, %cst_9 {dimension_numbers = #tpu.dot_dimension_numbers<[1], [0], [0], [1], [0, 0, 1, 1], [], []>} : vector<8x64xf32>, vector<64x32xf32>, vector<8x32xf32> -> vector<8x32xf32>
    %c0_10 = arith.constant 0 : index
    %c0_11 = arith.constant 0 : index
    %15 = vector.load %arg6[%c0_10, %c0_11] : memref<1x32xf32, #tpu.memory_space<vmem>>, vector<1x32xf32>
    %16 = vector.broadcast %15 : vector<1x32xf32> to vector<8x32xf32>
    %17 = arith.addf %14, %16 : vector<8x32xf32>
    %cst_12 = arith.constant 0.000000e+00 : f32
    %18 = vector.broadcast %cst_12 : f32 to vector<8x32xf32>
    %19 = arith.cmpf oge, %17, %18 : vector<8x32xf32>
    %20 = vector.broadcast %1 : f32 to vector<8x32xf32>
    %21 = arith.mulf %20, %17 : vector<8x32xf32>
    %22 = arith.select %19, %17, %21 : vector<8x32xi1>, vector<8x32xf32>
    %c0_13 = arith.constant 0 : index
    %c0_14 = arith.constant 0 : index
    %23 = vector.load %arg7[%c0_13, %c0_14] : memref<8x32xf32, #tpu.memory_space<vmem>>, vector<8x32xf32>
    tpu.vector_store %arg7[%c0_13, %c0_14], %22 {strides = array<i32>} : memref<8x32xf32, #tpu.memory_space<vmem>>, vector<8x32xf32>,
    return
  }
  func.func @transform_0(%arg0: i32) -> i32 {
    %c0_i32 = arith.constant 0 : i32
    %c0_i32_0 = arith.constant 0 : i32
    return %c0_i32 : i32
  }
  func.func @transform_1(%arg0: i32) -> (i32, i32) {
    %c0_i32 = arith.constant 0 : i32
    %c0_i32_0 = arith.constant 0 : i32
    return %arg0, %c0_i32 : i32, i32
  }
  func.func @transform_2(%arg0: i32) -> (i32, i32) {
    %c0_i32 = arith.constant 0 : i32
    %c0_i32_0 = arith.constant 0 : i32
    %c0_i32_1 = arith.constant 0 : i32
    return %c0_i32, %c0_i32_0 : i32, i32
  }
  func.func @transform_3(%arg0: i32) -> (i32, i32) {
    %c0_i32 = arith.constant 0 : i32
    %c0_i32_0 = arith.constant 0 : i32
    %c0_i32_1 = arith.constant 0 : i32
    return %c0_i32, %c0_i32_0 : i32, i32
  }
  func.func @transform_4(%arg0: i32) -> (i32, i32) {
    %c0_i32 = arith.constant 0 : i32
    %c0_i32_0 = arith.constant 0 : i32
    %c0_i32_1 = arith.constant 0 : i32
    return %c0_i32, %c0_i32_0 : i32, i32
  }
  func.func @transform_5(%arg0: i32) -> (i32, i32) {
    %c0_i32 = arith.constant 0 : i32
    %c0_i32_0 = arith.constant 0 : i32
    %c0_i32_1 = arith.constant 0 : i32
    return %c0_i32, %c0_i32_0 : i32, i32
  }
  func.func @transform_6(%arg0: i32) -> (i32, i32) {
    %c0_i32 = arith.constant 0 : i32
    %c0_i32_0 = arith.constant 0 : i32
    return %arg0, %c0_i32 : i32, i32
  }
}

module attributes {stable_mosaic.version = 11 : i64} {
  func.func @_basic_block2_kernel(%arg0: i32, %arg1: memref<2xf32, #tpu.memory_space<smem>>, %arg2: memref<8x32xf32, #tpu.memory_space<vmem>>, %arg3: memref<32x64xf32, #tpu.memory_space<vmem>>, %arg4: memref<1x64xf32, #tpu.memory_space<vmem>>, %arg5: memref<64x32xf32, #tpu.memory_space<vmem>>, %arg6: memref<1x32xf32, #tpu.memory_space<vmem>>, %arg7: memref<8x32xf32, #tpu.memory_space<vmem>>) attributes {dimension_semantics = [#tpu.dimension_semantics<parallel>], iteration_bounds = array<i64: 1>, scalar_prefetch = 0 : i64, scratch_operands = 0 : i64, tpu.core_type = #tpu.core_type<tc>, window_params = [{transform_indices = @transform_0, window_bounds = array<i64: 2>}, {transform_indices = @transform_1, window_bounds = array<i64: 8, 32>}, {pipeline_mode = #tpu.pipeline_mode<synchronous>, transform_indices = @transform_2, window_bounds = array<i64: 32, 64>}, {pipeline_mode = #tpu.pipeline_mode<synchronous>, transform_indices = @transform_3, window_bounds = array<i64: 1, 64>}, {pipeline_mode = #tpu.pipeline_mode<synchronous>, transform_indices = @transform_4, window_bounds = array<i64: 64, 32>}, {pipeline_mode = #tpu.pipeline_mode<synchronous>, transform_indices = @transform_5, window_bounds = array<i64: 1, 32>}, {transform_indices = @transform_6, window_bounds = array<i64: 8, 32>}]} {
    %c0 = arith.constant 0 : index
    %0 = memref.load %arg1[%c0] : memref<2xf32, #tpu.memory_space<smem>>
    %c1 = arith.constant 1 : index
    %1 = memref.load %arg1[%c1] : memref<2xf32, #tpu.memory_space<smem>>
    %c0_0 = arith.constant 0 : index
    %c0_1 = arith.constant 0 : index
    %2 = vector.load %arg2[%c0_0, %c0_1] : memref<8x32xf32, #tpu.memory_space<vmem>>, vector<8x32xf32>
    %c0_2 = arith.constant 0 : index
    %c0_3 = arith.constant 0 : index
    %3 = vector.load %arg3[%c0_2, %c0_3] : memref<32x64xf32, #tpu.memory_space<vmem>>, vector<32x64xf32>
    %cst = arith.constant dense<0.000000e+00> : vector<8x64xf32>
    %4 = tpu.matmul %2, %3, %cst {dimension_numbers = #tpu.dot_dimension_numbers<[1], [0], [0], [1], [0, 0, 1, 1], [], []>} : vector<8x32xf32>, vector<32x64xf32>, vector<8x64xf32> -> vector<8x64xf32>
    %c0_4 = arith.constant 0 : index
    %c0_5 = arith.constant 0 : index
    %5 = vector.load %arg4[%c0_4, %c0_5] : memref<1x64xf32, #tpu.memory_space<vmem>>, vector<1x64xf32>
    %6 = vector.broadcast %5 : vector<1x64xf32> to vector<8x64xf32>
    %7 = arith.addf %4, %6 : vector<8x64xf32>
    %cst_6 = arith.constant 0.000000e+00 : f32
    %8 = vector.broadcast %cst_6 : f32 to vector<8x64xf32>
    %9 = arith.cmpf oge, %7, %8 : vector<8x64xf32>
    %10 = vector.broadcast %0 : f32 to vector<8x64xf32>
    %11 = arith.mulf %10, %7 : vector<8x64xf32>
    %12 = arith.select %9, %7, %11 : vector<8x64xi1>, vector<8x64xf32>
    %c0_7 = arith.constant 0 : index
    %c0_8 = arith.constant 0 : index
    %13 = vector.load %arg5[%c0_7, %c0_8] : memref<64x32xf32, #tpu.memory_space<vmem>>, vector<64x32xf32>
    %cst_9 = arith.constant dense<0.000000e+00> : vector<8x32xf32>
    %14 = tpu.matmul %12, %13, %cst_9 {dimension_numbers = #tpu.dot_dimension_numbers<[1], [0], [0], [1], [0, 0, 1, 1], [], []>} : vector<8x64xf32>, vector<64x32xf32>, vector<8x32xf32> -> vector<8x32xf32>
    %c0_10 = arith.constant 0 : index
    %c0_11 = arith.constant 0 : index
    %15 = vector.load %arg6[%c0_10, %c0_11] : memref<1x32xf32, #tpu.memory_space<vmem>>, vector<1x32xf32>
    %16 = vector.broadcast %15 : vector<1x32xf32> to vector<8x32xf32>
    %17 = arith.addf %14, %16 : vector<8x32xf32>
    %cst_12 = arith.constant 0.000000e+00 : f32
    %18 = vector.broadcast %cst_12 : f32 to vector<8x32xf32>
    %19 = arith.cmpf oge, %17, %18 : vector<8x32xf32>
    %20 = vector.broadcast %1 : f32 to vector<8x32xf32>
    %21 = arith.mulf %20, %17 : vector<8x32xf32>
    %22 = arith.select %19, %17, %21 : vector<8x32xi1>, vector<8x32xf32>
    %c0_13 = arith.constant 0 : index
    %c0_14 = arith.constant 0 : index
    %23 = vector.load %arg7[%c0_13, %c0_14] : memref<8x32xf32, #tpu.memory_space<vmem>>, vector<8x32xf32>
    tpu.vector_store %arg7[%c0_13, %c0_14], %22 {strides = array<i32>} : memref<8x32xf32, #tpu.memory_space<vmem>>, vector<8x32xf32>,
    return
  }
  func.func @transform_0(%arg0: i32) -> i32 {
    %c0_i32 = arith.constant 0 : i32
    %c0_i32_0 = arith.constant 0 : i32
    return %c0_i32 : i32
  }
  func.func @transform_1(%arg0: i32) -> (i32, i32) {
    %c0_i32 = arith.constant 0 : i32
    %c0_i32_0 = arith.constant 0 : i32
    return %arg0, %c0_i32 : i32, i32
  }
  func.func @transform_2(%arg0: i32) -> (i32, i32) {
    %c0_i32 = arith.constant 0 : i32
    %c0_i32_0 = arith.constant 0 : i32
    %c0_i32_1 = arith.constant 0 : i32
    return %c0_i32, %c0_i32_0 : i32, i32
  }
  func.func @transform_3(%arg0: i32) -> (i32, i32) {
    %c0_i32 = arith.constant 0 : i32
    %c0_i32_0 = arith.constant 0 : i32
    %c0_i32_1 = arith.constant 0 : i32
    return %c0_i32, %c0_i32_0 : i32, i32
  }
  func.func @transform_4(%arg0: i32) -> (i32, i32) {
    %c0_i32 = arith.constant 0 : i32
    %c0_i32_0 = arith.constant 0 : i32
    %c0_i32_1 = arith.constant 0 : i32
    return %c0_i32, %c0_i32_0 : i32, i32
  }
  func.func @transform_5(%arg0: i32) -> (i32, i32) {
    %c0_i32 = arith.constant 0 : i32
    %c0_i32_0 = arith.constant 0 : i32
    %c0_i32_1 = arith.constant 0 : i32
    return %c0_i32, %c0_i32_0 : i32, i32
  }
  func.func @transform_6(%arg0: i32) -> (i32, i32) {
    %c0_i32 = arith.constant 0 : i32
    %c0_i32_0 = arith.constant 0 : i32
    return %arg0, %c0_i32 : i32, i32
  }
}

</mosaic_0001>

<llo_original>
// kernel: tpu_custom_call.1
$region0: #{tpu_custom_call.1}
  #allocation0 [shape = 'u32[]', space=smem, size = 0x4, offset = 0x4, fixed_abs, tag = 'smem constant byte address 0x4 - core index']
  #allocation1 [shape = 'u32[72,128]{1,0:T(1,128)}', space=vmem, size = 0x9000, scoped, tag = 'internal scratch']
  %s0 = inlined_call_operand.vmem [shape: f32[2], index: 0, kind: input, shape index: {}]
  %s1 = inlined_call_operand.vmem [shape: f32[8,32], index: 1, kind: input, shape index: {}]
  %s2 = inlined_call_operand.vmem [shape: f32[32,64], index: 2, kind: input, shape index: {}]
  %s3 = inlined_call_operand.vmem [shape: f32[1,64], index: 3, kind: input, shape index: {}]
  %s4 = inlined_call_operand.vmem [shape: f32[64,32], index: 4, kind: input, shape index: {}]
  %s5 = inlined_call_operand.vmem [shape: f32[1,32], index: 5, kind: input, shape index: {}]
  %s6 = inlined_call_operand.hbm [shape: f32[8,32], index: 6, kind: output, shape index: {}]
  %s7 = sld [smem:[#allocation0]]
  $region38: #{tpu_custom_call.1} parent=0
    _
  %s9 = ssub.s32 1, %s7
  %s10 = scalar_select 0, %s9, %s7
  $region1: #{tpu_custom_call.1} parent=0
    #allocation2 [shape = 'u8[512]{0}', space=smem, size = 0x200, scoped, tag = 'input window, operand 0, single buffered']
    #allocation3 [shape = 's32[1]{0}', space=sflag, size = 0x4, scoped, tag = 'scoped memory for tpu_custom_call.1']
    #allocation4 [shape = 's32[1]{0}', space=sflag, size = 0x4, scoped, tag = 'scoped memory for tpu_custom_call.1']
    #allocation5 [shape = 'u8[4096]{0}', space=vmem, size = 0x1000, scoped, tag = 'output window, operand 0, single buffered']
    %11 = vsyncpa [#allocation4], 0
    %12 = vsyncpa [#allocation3], 0
    // Predicated region
    $region2: #{tpu_custom_call.1} parent=1 // pred_check
      _
    $region3: #{tpu_custom_call.1} parent=1 // pred_check_branch
      %14 = sbr.rel (0) target = $region5
    $region4: #{tpu_custom_call.1} parent=1 // pred_region
      %16 = vsyncadd [#allocation4], 0
      %s18 = sshll.u32 %s0, 4
      %s19 = int_to_ptr.vmem [resolvable:$true] %s18
      %21 = dma.vmem_to_smem %s19, 16, [#allocation2], [#allocation4]
    $region5: #{tpu_custom_call.1} parent=1 // pred_fallthru
      _
    // Predicated region
    $region6: #{tpu_custom_call.1} parent=1 // pred_check
      _
    $region7: #{tpu_custom_call.1} parent=1 // pred_check_branch
      %23 = sbr.rel (0) target = $region9
    $region8: #{tpu_custom_call.1} parent=1 // pred_region
      _
    $region9: #{tpu_custom_call.1} parent=1 // pred_fallthru
      _
    // Predicated region
    $region10: #{tpu_custom_call.1} parent=1 // pred_check
      _
    $region11: #{tpu_custom_call.1} parent=1 // pred_check_branch
      %25 = sbr.rel (0) target = $region13
    $region12: #{tpu_custom_call.1} parent=1 // pred_region
      _
    $region13: #{tpu_custom_call.1} parent=1 // pred_fallthru
      _
    // Predicated region
    $region14: #{tpu_custom_call.1} parent=1 // pred_check
      _
    $region15: #{tpu_custom_call.1} parent=1 // pred_check_branch
      %27 = sbr.rel (0) target = $region17
    $region16: #{tpu_custom_call.1} parent=1 // pred_region
      _
    $region17: #{tpu_custom_call.1} parent=1 // pred_fallthru
      _
    // Predicated region
    $region18: #{tpu_custom_call.1} parent=1 // pred_check
      _
    $region19: #{tpu_custom_call.1} parent=1 // pred_check_branch
      %29 = sbr.rel (0) target = $region21
    $region20: #{tpu_custom_call.1} parent=1 // pred_region
      _
    $region21: #{tpu_custom_call.1} parent=1 // pred_fallthru
      _
    // Predicated region
    $region22: #{tpu_custom_call.1} parent=1 // pred_check
      _
    $region23: #{tpu_custom_call.1} parent=1 // pred_check_branch
      %31 = sbr.rel (0) target = $region25
    $region24: #{tpu_custom_call.1} parent=1 // pred_region
      _
    $region25: #{tpu_custom_call.1} parent=1 // pred_fallthru
      _
    // Predicated region
    $region26: #{tpu_custom_call.1} parent=1 // pred_check
      _
    $region27: #{tpu_custom_call.1} parent=1 // pred_check_branch
      %33 = sbr.rel (0) target = $region29
    $region28: #{tpu_custom_call.1} parent=1 // pred_region
      %35 = dma.done [#allocation4], 16
    $region29: #{tpu_custom_call.1} parent=1 // pred_fallthru
      _
    %36 = sfence
    %s37 = sld [smem:[#allocation2]]
    %s38 = sld [smem:[#allocation2 + $0x1]]
    %v39 = vld [vmem:[%s1] sm:$0xff]
    %v40 = vld [vmem:[%s2] sm:$0xff]
    %v41 = vld [vmem:[%s2 + $0x8] sm:$0xff]
    %v42 = vld [vmem:[%s2 + $0x10] sm:$0xff]
    %v43 = vld [vmem:[%s2 + $0x18] sm:$0xff]
    %v44 = vld [vmem:[%s3] sm:$0x1]
    %v46 = vperm.slane %v44, 0
    %vm48 = vcmask 261120
    %v50 = vsel %vm48, %v39, 0
    %52 = vmatpush.msra.mxu0 0.0
    %53 = vmatpush.msra.mxu0 0.0
    %54 = vmatpush.msra.mxu0 0.0
    %55 = vmatpush.msra.mxu0 0.0
    %56 = vmatpush.msra.mxu0 0.0
    %57 = vmatpush.msra.mxu0 0.0
    %58 = vmatpush.msra.mxu0 0.0
    %59 = vmatpush.msra.mxu0 0.0
    %60 = vmatpush.msra.mxu0 0.0
    %61 = vmatpush.msra.mxu0 0.0
    %62 = vmatpush.msra.mxu0 0.0
    %63 = vmatpush.msra.mxu0 0.0
    %64 = vmatpush.msra.mxu0 %v43
    %65 = vmatpush.msra.mxu0 %v42
    %66 = vmatpush.msra.mxu0 %v41
    %67 = vmatpush.msra.mxu0 %v40
    %68 = vmatmul.f32.gmra.mxu0 %v50
    %v69 = vpop.f32.mrf.mxu0
    %v70 = vadd.f32 %v46, %v69
    %71 = vdwg.mxu0
    %vm72 = vcmp.ge.f32.partialorder %v70, 0.0
    %v73 = vstv %s37
    %v74 = vmul.f32 %v73, %v70
    %v75 = vsel %vm72, %v70, %v74
    %v76 = vld [vmem:[%s4] sm:$0xff]
    %v77 = vld [vmem:[%s4 + $0x8] sm:$0xff]
    %v78 = vld [vmem:[%s4 + $0x10] sm:$0xff]
    %v79 = vld [vmem:[%s4 + $0x18] sm:$0xff]
    %v80 = vld [vmem:[%s4 + $0x20] sm:$0xff]
    %v81 = vld [vmem:[%s4 + $0x28] sm:$0xff]
    %v82 = vld [vmem:[%s4 + $0x30] sm:$0xff]
    %v83 = vld [vmem:[%s4 + $0x38] sm:$0xff]
    %v84 = vld [vmem:[%s5] sm:$0x1]
    %v86 = vperm.slane %v84, 0
    %vm88 = vcmask 523264
    %v90 = vsel %vm88, %v75, 0
    %92 = vmatpush.msra.mxu0 0.0
    %93 = vmatpush.msra.mxu0 0.0
    %94 = vmatpush.msra.mxu0 0.0
    %95 = vmatpush.msra.mxu0 0.0
    %96 = vmatpush.msra.mxu0 0.0
    %97 = vmatpush.msra.mxu0 0.0
    %98 = vmatpush.msra.mxu0 0.0
    %99 = vmatpush.msra.mxu0 0.0
    %100 = vmatpush.msra.mxu0 %v83
    %101 = vmatpush.msra.mxu0 %v82
    %102 = vmatpush.msra.mxu0 %v81
    %103 = vmatpush.msra.mxu0 %v80
    %104 = vmatpush.msra.mxu0 %v79
    %105 = vmatpush.msra.mxu0 %v78
    %106 = vmatpush.msra.mxu0 %v77
    %107 = vmatpush.msra.mxu0 %v76
    %108 = vmatmul.f32.gmra.mxu0 %v90
    %v109 = vpop.f32.mrf.mxu0
    %v110 = vadd.f32 %v86, %v109
    %111 = vdwg.mxu0
    %vm112 = vcmp.ge.f32.partialorder %v110, 0.0
    %v113 = vstv %s38
    %v114 = vmul.f32 %v113, %v110
    %v115 = vsel %vm112, %v110, %v114
    %116 = vst.msk [vmem:[#allocation5] sm:$0xff] %vm48, %v115
    // Predicated region
    $region30: #{tpu_custom_call.1} parent=1 // pred_check
      _
    $region31: #{tpu_custom_call.1} parent=1 // pred_check_branch
      %118 = sbr.rel (0) target = $region33
    $region32: #{tpu_custom_call.1} parent=1 // pred_region
      %120 = vsyncadd [#allocation3], 0
      %s122 = sshll.u32 [#allocation5], 4
      %s123 = int_to_ptr.vmem [resolvable:$true] %s122
      %s124 = sshll.u32 %s6, 4
      %s125 = int_to_ptr.hbm [resolvable:$true] %s124
      %127 = dma.vmem_to_hbm [thread:$0]  %s123, 128, %s125, [#allocation3]
    $region33: #{tpu_custom_call.1} parent=1 // pred_fallthru
      _
    // Predicated region
    $region34: #{tpu_custom_call.1} parent=1 // pred_check
      _
    $region35: #{tpu_custom_call.1} parent=1 // pred_check_branch
      %129 = sbr.rel (0) target = $region37
    $region36: #{tpu_custom_call.1} parent=1 // pred_region
      %131 = dma.done [#allocation3], 128
    $region37: #{tpu_custom_call.1} parent=1 // pred_fallthru
      _
    %132 = vsyncpa [#allocation3], 1
    %133 = vsyncpa [#allocation4], 1

// kernel: tpu_custom_call.1
$region0: #{tpu_custom_call.1}
  #allocation0 [shape = 'u32[]', space=smem, size = 0x4, offset = 0x4, fixed_abs, tag = 'smem constant byte address 0x4 - core index']
  #allocation1 [shape = 'u32[72,128]{1,0:T(1,128)}', space=vmem, size = 0x9000, scoped, tag = 'internal scratch']
  %s0 = inlined_call_operand.vmem [shape: f32[2], index: 0, kind: input, shape index: {}]
  %s1 = inlined_call_operand.vmem [shape: f32[8,32], index: 1, kind: input, shape index: {}]
  %s2 = inlined_call_operand.vmem [shape: f32[32,64], index: 2, kind: input, shape index: {}]
  %s3 = inlined_call_operand.vmem [shape: f32[1,64], index: 3, kind: input, shape index: {}]
  %s4 = inlined_call_operand.vmem [shape: f32[64,32], index: 4, kind: input, shape index: {}]
  %s5 = inlined_call_operand.vmem [shape: f32[1,32], index: 5, kind: input, shape index: {}]
  %s6 = inlined_call_operand.hbm [shape: f32[8,32], index: 6, kind: output, shape index: {}]
  %s7 = sld [smem:[#allocation0]]
  $region38: #{tpu_custom_call.1} parent=0
    _
  %s9 = ssub.s32 1, %s7
  %s10 = scalar_select 0, %s9, %s7
  $region1: #{tpu_custom_call.1} parent=0
    #allocation2 [shape = 'u8[512]{0}', space=smem, size = 0x200, scoped, tag = 'input window, operand 0, single buffered']
    #allocation3 [shape = 's32[1]{0}', space=sflag, size = 0x4, scoped, tag = 'scoped memory for tpu_custom_call.1']
    #allocation4 [shape = 's32[1]{0}', space=sflag, size = 0x4, scoped, tag = 'scoped memory for tpu_custom_call.1']
    #allocation5 [shape = 'u8[4096]{0}', space=vmem, size = 0x1000, scoped, tag = 'output window, operand 0, single buffered']
    %11 = vsyncpa [#allocation4], 0
    %12 = vsyncpa [#allocation3], 0
    // Predicated region
    $region2: #{tpu_custom_call.1} parent=1 // pred_check
      _
    $region3: #{tpu_custom_call.1} parent=1 // pred_check_branch
      %14 = sbr.rel (0) target = $region5
    $region4: #{tpu_custom_call.1} parent=1 // pred_region
      %16 = vsyncadd [#allocation4], 0
      %s18 = sshll.u32 %s0, 4
      %s19 = int_to_ptr.vmem [resolvable:$true] %s18
      %21 = dma.vmem_to_smem %s19, 16, [#allocation2], [#allocation4]
    $region5: #{tpu_custom_call.1} parent=1 // pred_fallthru
      _
    // Predicated region
    $region6: #{tpu_custom_call.1} parent=1 // pred_check
      _
    $region7: #{tpu_custom_call.1} parent=1 // pred_check_branch
      %23 = sbr.rel (0) target = $region9
    $region8: #{tpu_custom_call.1} parent=1 // pred_region
      _
    $region9: #{tpu_custom_call.1} parent=1 // pred_fallthru
      _
    // Predicated region
    $region10: #{tpu_custom_call.1} parent=1 // pred_check
      _
    $region11: #{tpu_custom_call.1} parent=1 // pred_check_branch
      %25 = sbr.rel (0) target = $region13
    $region12: #{tpu_custom_call.1} parent=1 // pred_region
      _
    $region13: #{tpu_custom_call.1} parent=1 // pred_fallthru
      _
    // Predicated region
    $region14: #{tpu_custom_call.1} parent=1 // pred_check
      _
    $region15: #{tpu_custom_call.1} parent=1 // pred_check_branch
      %27 = sbr.rel (0) target = $region17
    $region16: #{tpu_custom_call.1} parent=1 // pred_region
      _
    $region17: #{tpu_custom_call.1} parent=1 // pred_fallthru
      _
    // Predicated region
    $region18: #{tpu_custom_call.1} parent=1 // pred_check
      _
    $region19: #{tpu_custom_call.1} parent=1 // pred_check_branch
      %29 = sbr.rel (0) target = $region21
    $region20: #{tpu_custom_call.1} parent=1 // pred_region
      _
    $region21: #{tpu_custom_call.1} parent=1 // pred_fallthru
      _
    // Predicated region
    $region22: #{tpu_custom_call.1} parent=1 // pred_check
      _
    $region23: #{tpu_custom_call.1} parent=1 // pred_check_branch
      %31 = sbr.rel (0) target = $region25
    $region24: #{tpu_custom_call.1} parent=1 // pred_region
      _
    $region25: #{tpu_custom_call.1} parent=1 // pred_fallthru
      _
    // Predicated region
    $region26: #{tpu_custom_call.1} parent=1 // pred_check
      _
    $region27: #{tpu_custom_call.1} parent=1 // pred_check_branch
      %33 = sbr.rel (0) target = $region29
    $region28: #{tpu_custom_call.1} parent=1 // pred_region
      %35 = dma.done [#allocation4], 16
    $region29: #{tpu_custom_call.1} parent=1 // pred_fallthru
      _
    %36 = sfence
    %s37 = sld [smem:[#allocation2]]
    %s38 = sld [smem:[#allocation2 + $0x1]]
    %v39 = vld [vmem:[%s1] sm:$0xff]
    %v40 = vld [vmem:[%s2] sm:$0xff]
    %v41 = vld [vmem:[%s2 + $0x8] sm:$0xff]
    %v42 = vld [vmem:[%s2 + $0x10] sm:$0xff]
    %v43 = vld [vmem:[%s2 + $0x18] sm:$0xff]
    %v44 = vld [vmem:[%s3] sm:$0x1]
    %v46 = vperm.slane %v44, 0
    %vm48 = vcmask 261120
    %v50 = vsel %vm48, %v39, 0
    %52 = vmatpush.msra.mxu0 0.0
    %53 = vmatpush.msra.mxu0 0.0
    %54 = vmatpush.msra.mxu0 0.0
    %55 = vmatpush.msra.mxu0 0.0
    %56 = vmatpush.msra.mxu0 0.0
    %57 = vmatpush.msra.mxu0 0.0
    %58 = vmatpush.msra.mxu0 0.0
    %59 = vmatpush.msra.mxu0 0.0
    %60 = vmatpush.msra.mxu0 0.0
    %61 = vmatpush.msra.mxu0 0.0
    %62 = vmatpush.msra.mxu0 0.0
    %63 = vmatpush.msra.mxu0 0.0
    %64 = vmatpush.msra.mxu0 %v43
    %65 = vmatpush.msra.mxu0 %v42
    %66 = vmatpush.msra.mxu0 %v41
    %67 = vmatpush.msra.mxu0 %v40
    %68 = vmatmul.f32.gmra.mxu0 %v50
    %v69 = vpop.f32.mrf.mxu0
    %v70 = vadd.f32 %v46, %v69
    %71 = vdwg.mxu0
    %vm72 = vcmp.ge.f32.partialorder %v70, 0.0
    %v73 = vstv %s37
    %v74 = vmul.f32 %v73, %v70
    %v75 = vsel %vm72, %v70, %v74
    %v76 = vld [vmem:[%s4] sm:$0xff]
    %v77 = vld [vmem:[%s4 + $0x8] sm:$0xff]
    %v78 = vld [vmem:[%s4 + $0x10] sm:$0xff]
    %v79 = vld [vmem:[%s4 + $0x18] sm:$0xff]
    %v80 = vld [vmem:[%s4 + $0x20] sm:$0xff]
    %v81 = vld [vmem:[%s4 + $0x28] sm:$0xff]
    %v82 = vld [vmem:[%s4 + $0x30] sm:$0xff]
    %v83 = vld [vmem:[%s4 + $0x38] sm:$0xff]
    %v84 = vld [vmem:[%s5] sm:$0x1]
    %v86 = vperm.slane %v84, 0
    %vm88 = vcmask 523264
    %v90 = vsel %vm88, %v75, 0
    %92 = vmatpush.msra.mxu0 0.0
    %93 = vmatpush.msra.mxu0 0.0
    %94 = vmatpush.msra.mxu0 0.0
    %95 = vmatpush.msra.mxu0 0.0
    %96 = vmatpush.msra.mxu0 0.0
    %97 = vmatpush.msra.mxu0 0.0
    %98 = vmatpush.msra.mxu0 0.0
    %99 = vmatpush.msra.mxu0 0.0
    %100 = vmatpush.msra.mxu0 %v83
    %101 = vmatpush.msra.mxu0 %v82
    %102 = vmatpush.msra.mxu0 %v81
    %103 = vmatpush.msra.mxu0 %v80
    %104 = vmatpush.msra.mxu0 %v79
    %105 = vmatpush.msra.mxu0 %v78
    %106 = vmatpush.msra.mxu0 %v77
    %107 = vmatpush.msra.mxu0 %v76
    %108 = vmatmul.f32.gmra.mxu0 %v90
    %v109 = vpop.f32.mrf.mxu0
    %v110 = vadd.f32 %v86, %v109
    %111 = vdwg.mxu0
    %vm112 = vcmp.ge.f32.partialorder %v110, 0.0
    %v113 = vstv %s38
    %v114 = vmul.f32 %v113, %v110
    %v115 = vsel %vm112, %v110, %v114
    %116 = vst.msk [vmem:[#allocation5] sm:$0xff] %vm48, %v115
    // Predicated region
    $region30: #{tpu_custom_call.1} parent=1 // pred_check
      _
    $region31: #{tpu_custom_call.1} parent=1 // pred_check_branch
      %118 = sbr.rel (0) target = $region33
    $region32: #{tpu_custom_call.1} parent=1 // pred_region
      %120 = vsyncadd [#allocation3], 0
      %s122 = sshll.u32 [#allocation5], 4
      %s123 = int_to_ptr.vmem [resolvable:$true] %s122
      %s124 = sshll.u32 %s6, 4
      %s125 = int_to_ptr.hbm [resolvable:$true] %s124
      %127 = dma.vmem_to_hbm [thread:$0]  %s123, 128, %s125, [#allocation3]
    $region33: #{tpu_custom_call.1} parent=1 // pred_fallthru
      _
    // Predicated region
    $region34: #{tpu_custom_call.1} parent=1 // pred_check
      _
    $region35: #{tpu_custom_call.1} parent=1 // pred_check_branch
      %129 = sbr.rel (0) target = $region37
    $region36: #{tpu_custom_call.1} parent=1 // pred_region
      %131 = dma.done [#allocation3], 128
    $region37: #{tpu_custom_call.1} parent=1 // pred_fallthru
      _
    %132 = vsyncpa [#allocation3], 1
    %133 = vsyncpa [#allocation4], 1

</llo_original>
